<compile_context>
chip_gen: v7x
topology: tpu7x:2x2x1
jax: 0.10.0
libtpu: 0.0.40
codegen_flags: <defaults>
</compile_context>

<pallas_src>
import functools
from typing import NamedTuple

import jax
import jax.numpy as jnp
from jax.experimental import pallas as pl
from jax.experimental.pallas import tpu as pltpu


# ----------------------------------------------------------------------------
# Kernel
# ----------------------------------------------------------------------------
def actor_mlp_kernel(x_ref, w1_ref, b1_ref, w2_ref, b2_ref, o_ref, *,
                     tanh_in_bf16):
    # x_ref:  (TB, state_dim)   compute dtype (bf16 or f32)
    # w1_ref: (state_dim, NWp)  compute dtype
    # b1_ref: (1, NWp)          f32
    # w2_ref: (NWp, NWp)        compute dtype
    # b2_ref: (1, NWp)          f32
    # o_ref:  (TB, NWp)         out dtype (bf16 by default)
    h = jnp.tanh(
        jnp.dot(x_ref[...], w1_ref[...], preferred_element_type=jnp.float32)
        + b1_ref[...]
    )
    h = h.astype(w2_ref.dtype)  # feed the MXU in the compute dtype
    z = (jnp.dot(h, w2_ref[...], preferred_element_type=jnp.float32)
         + b2_ref[...])
    if tanh_in_bf16:
        # v6e / v7x: bf16 VPU+EUP -> run the epilogue tanh in bf16.
        o_ref[...] = jnp.tanh(z.astype(jnp.bfloat16)).astype(o_ref.dtype)
    else:
        # v5e has no bf16 VPU/EUP: tanh in f32, cast only for the store.
        o_ref[...] = jnp.tanh(z).astype(o_ref.dtype)


# ----------------------------------------------------------------------------
# Helpers
# ----------------------------------------------------------------------------
def _round_up(x, m):
    return (x + m - 1) // m * m


def _tpu_kind():
    try:
        return jax.devices()[0].device_kind.lower()
    except Exception:
        return ""


def _has_bf16_eup(kind):
    # bf16 VPU/EUP available on v6e and v7x (safe default: False -> f32 tanh).
    return ("v6" in kind) or ("v7" in kind)


def _has_multi_tensorcore(kind):
    # Chips with >1 TensorCore sharing the megacore 'parallel' grid axis.
    return ("v7" in kind) or ("v5p" in kind) or ("v4" in kind)


def _maybe_buffered_spec(block_shape, index_map, buffer_count):
    """BlockSpec with optional N-deep pipelining; falls back gracefully."""
    if buffer_count is not None and hasattr(pl, "Buffered"):
        try:
            return pl.BlockSpec(block_shape, index_map,
                                pipeline_mode=pl.Buffered(buffer_count))
        except TypeError:
            pass
    return pl.BlockSpec(block_shape, index_map)


# ----------------------------------------------------------------------------
# Parameter preparation (do ONCE per parameter update, not per forward call)
# ----------------------------------------------------------------------------
class ActorParams(NamedTuple):
    w1_p: jax.Array      # (state_dim, nw_p)  compute dtype
    b1_p: jax.Array      # (1, nw_p)          f32
    w2_p: jax.Array      # (nw_p, nw_p)       compute dtype
    b2_p: jax.Array      # (1, nw_p)          f32
    state_dim: int
    net_width: int


def prepare_actor_params(w1, b1, w2, b2, compute_dtype=jnp.bfloat16):
    """Pad hidden width to a lane-dense multiple of 128 and cast once."""
    state_dim, net_width = w1.shape
    nw_p = _round_up(net_width, 128)

    w1_p = jnp.zeros((state_dim, nw_p), compute_dtype)
    w1_p = w1_p.at[:, :net_width].set(w1.astype(compute_dtype))
    w2_p = jnp.zeros((nw_p, nw_p), compute_dtype)
    w2_p = w2_p.at[:net_width, :net_width].set(w2.astype(compute_dtype))
    b1_p = jnp.zeros((1, nw_p), jnp.float32)
    b1_p = b1_p.at[:, :net_width].set(b1.astype(jnp.float32).reshape(1, -1))
    b2_p = jnp.zeros((1, nw_p), jnp.float32)
    b2_p = b2_p.at[:, :net_width].set(b2.astype(jnp.float32).reshape(1, -1))

    return ActorParams(w1_p, b1_p, w2_p, b2_p, int(state_dim), int(net_width))


# ----------------------------------------------------------------------------
# Forward
# ----------------------------------------------------------------------------
def actor_forward(state, params: ActorParams, *, tile_b_max=4096,
                  out_dtype=jnp.bfloat16, slice_output=True,
                  buffer_count=None):
    """Fused Actor.forward.  state: [B, state_dim]."""
    B, state_dim = state.shape
    assert state_dim == params.state_dim
    nw_p = params.w1_p.shape[1]
    net_width = params.net_width
    compute_dtype = params.w1_p.dtype

    kind = _tpu_kind()
    tanh_in_bf16 = (jnp.dtype(out_dtype) == jnp.dtype(jnp.bfloat16)
                    and _has_bf16_eup(kind))

    # ---- batch tiling: big tiles, minimal padding, >=2 steps on 2-TC chips --
    num_tiles = max(1, -(-B // tile_b_max))
    if _has_multi_tensorcore(kind) and B >= 16:
        num_tiles = max(num_tiles, 2)
    tile_b = _round_up(-(-B // num_tiles), 8)
    B_p = tile_b * num_tiles

    x = state.astype(compute_dtype)
    if B_p != B:
        x = jnp.pad(x, ((0, B_p - B), (0, 0)))

    in_itemsize = jnp.dtype(compute_dtype).itemsize
    out_itemsize = jnp.dtype(out_dtype).itemsize
    cost = pl.CostEstimate(
        flops=2 * B_p * (state_dim * nw_p + nw_p * nw_p),
        transcendentals=2 * B_p * nw_p,
        bytes_accessed=(B_p * state_dim * in_itemsize             # x in
                        + (state_dim + nw_p) * nw_p * in_itemsize  # weights
                        + 2 * nw_p * 4                             # biases
                        + B_p * nw_p * out_itemsize),              # out
    )

    kernel = functools.partial(actor_mlp_kernel, tanh_in_bf16=tanh_in_bf16)

    out_p = pl.pallas_call(
        kernel,
        out_shape=jax.ShapeDtypeStruct((B_p, nw_p), out_dtype),
        grid_spec=pltpu.PrefetchScalarGridSpec(
            num_scalar_prefetch=0,
            grid=(num_tiles,),
            in_specs=[
                _maybe_buffered_spec((tile_b, state_dim), lambda i: (i, 0),
                                     buffer_count),
                # constant index_maps -> weight/bias DMAs hoisted out of loop
                pl.BlockSpec((state_dim, nw_p), lambda i: (0, 0)),
                pl.BlockSpec((1, nw_p), lambda i: (0, 0)),
                pl.BlockSpec((nw_p, nw_p), lambda i: (0, 0)),
                pl.BlockSpec((1, nw_p), lambda i: (0, 0)),
            ],
            out_specs=_maybe_buffered_spec((tile_b, nw_p), lambda i: (i, 0),
                                           buffer_count),
        ),
        compiler_params=pltpu.CompilerParams(
            dimension_semantics=("parallel",),
        ),
        cost_estimate=cost,
    )(x, params.w1_p, params.b1_p, params.w2_p, params.b2_p)

    if not slice_output:
        # Let a surrounding jit fuse the slice at the consumer instead of
        # paying an extra read/copy of the padded slab here.
        return out_p
    return out_p[:B, :net_width]


# ----------------------------------------------------------------------------
# Reference & init
# ----------------------------------------------------------------------------
def reference_forward(state, w1, b1, w2, b2):
    """Plain-JAX f32 reference of Actor.forward."""
    h = jnp.tanh(jnp.dot(state, w1) + b1.reshape(1, -1))
    return jnp.tanh(jnp.dot(h, w2) + b2.reshape(1, -1))


def init_linear_params(key, fan_in, fan_out, dtype=jnp.float32):
    # Mimics PyTorch nn.Linear default init: U(-1/sqrt(fan_in), 1/sqrt(fan_in))
    kw, kb = jax.random.split(key)
    bound = 1.0 / jnp.sqrt(jnp.asarray(fan_in, dtype))
    # weight stored as [in, out] so the kernel computes x @ W
    w = jax.random.uniform(kw, (fan_in, fan_out), dtype,
                           minval=-bound, maxval=bound)
    b = jax.random.uniform(kb, (fan_out,), dtype, minval=-bound, maxval=bound)
    return w, b


if __name__ == "__main__":
    # Small shapes consistent with the module's forward():
    #   state: [batch, state_dim], hidden size net_width.
    batch, state_dim, net_width = 8, 16, 32

    key = jax.random.PRNGKey(0)
    k_state, k_l1, k_l2 = jax.random.split(key, 3)

    state = jax.random.normal(k_state, (batch, state_dim), jnp.float32)
    w1, b1 = init_linear_params(k_l1, state_dim, net_width)
    w2, b2 = init_linear_params(k_l2, net_width, net_width)

    # TODO(synk): the `pi()` method's per-action softmax heads (self.net2) are
    # separate modules not part of forward(); only forward() is implemented.

    ref = reference_forward(state, w1, b1, w2, b2)

    # Default fast path: bf16-streamed weights/activations, f32 accumulation,
    # bf16 output store. Params are prepared ONCE and reused across calls.
    params = prepare_actor_params(w1, b1, w2, b2)          # cache this
    out = actor_forward(state, params)
    out = jax.block_until_ready(out)
    assert out.shape == (batch, net_width)
    assert jnp.allclose(out.astype(jnp.float32), ref, atol=2e-2, rtol=2e-2)

    # Full-precision path matches the f32 reference tightly.
    params_f32 = prepare_actor_params(w1, b1, w2, b2,
                                      compute_dtype=jnp.float32)
    out_f32 = actor_forward(state, params_f32, out_dtype=jnp.float32)
    out_f32 = jax.block_until_ready(out_f32)
    assert jnp.allclose(out_f32, ref, atol=1e-5, rtol=1e-5)

    print("KERNEL_OK")
</pallas_src>

<mosaic_0001>
module attributes {stable_mosaic.version = 11 : i64} {
  func.func @actor_mlp_kernel(%arg0: i32, %arg1: memref<8x16xbf16, #tpu.memory_space<vmem>>, %arg2: memref<16x128xbf16, #tpu.memory_space<vmem>>, %arg3: memref<1x128xf32, #tpu.memory_space<vmem>>, %arg4: memref<128x128xbf16, #tpu.memory_space<vmem>>, %arg5: memref<1x128xf32, #tpu.memory_space<vmem>>, %arg6: memref<8x128xbf16, #tpu.memory_space<vmem>>) attributes {dimension_semantics = [#tpu.dimension_semantics<parallel>], iteration_bounds = array<i64: 1>, scalar_prefetch = 0 : i64, scratch_operands = 0 : i64, tpu.core_type = #tpu.core_type<tc>, window_params = [{transform_indices = @transform_0, window_bounds = array<i64: 8, 16>}, {pipeline_mode = #tpu.pipeline_mode<synchronous>, transform_indices = @transform_1, window_bounds = array<i64: 16, 128>}, {pipeline_mode = #tpu.pipeline_mode<synchronous>, transform_indices = @transform_2, window_bounds = array<i64: 1, 128>}, {pipeline_mode = #tpu.pipeline_mode<synchronous>, transform_indices = @transform_3, window_bounds = array<i64: 128, 128>}, {pipeline_mode = #tpu.pipeline_mode<synchronous>, transform_indices = @transform_4, window_bounds = array<i64: 1, 128>}, {transform_indices = @transform_5, window_bounds = array<i64: 8, 128>}]} {
    %c0 = arith.constant 0 : index
    %c0_0 = arith.constant 0 : index
    %0 = vector.load %arg1[%c0, %c0_0] : memref<8x16xbf16, #tpu.memory_space<vmem>>, vector<8x16xbf16>
    %c0_1 = arith.constant 0 : index
    %c0_2 = arith.constant 0 : index
    %1 = vector.load %arg2[%c0_1, %c0_2] : memref<16x128xbf16, #tpu.memory_space<vmem>>, vector<16x128xbf16>
    %cst = arith.constant dense<0.000000e+00> : vector<8x128xf32>
    %2 = tpu.matmul %0, %1, %cst {dimension_numbers = #tpu.dot_dimension_numbers<[1], [0], [0], [1], [0, 0, 1, 1], [], []>} : vector<8x16xbf16>, vector<16x128xbf16>, vector<8x128xf32> -> vector<8x128xf32>
    %c0_3 = arith.constant 0 : index
    %c0_4 = arith.constant 0 : index
    %3 = vector.load %arg3[%c0_3, %c0_4] : memref<1x128xf32, #tpu.memory_space<vmem>>, vector<1x128xf32>
    %4 = vector.broadcast %3 : vector<1x128xf32> to vector<8x128xf32>
    %5 = arith.addf %2, %4 : vector<8x128xf32>
    %6 = math.tanh %5 : vector<8x128xf32>
    %7 = arith.truncf %6 : vector<8x128xf32> to vector<8x128xbf16>
    %c0_5 = arith.constant 0 : index
    %c0_6 = arith.constant 0 : index
    %8 = vector.load %arg4[%c0_5, %c0_6] : memref<128x128xbf16, #tpu.memory_space<vmem>>, vector<128x128xbf16>
    %cst_7 = arith.constant dense<0.000000e+00> : vector<8x128xf32>
    %9 = tpu.matmul %7, %8, %cst_7 {dimension_numbers = #tpu.dot_dimension_numbers<[1], [0], [0], [1], [0, 0, 1, 1], [], []>} : vector<8x128xbf16>, vector<128x128xbf16>, vector<8x128xf32> -> vector<8x128xf32>
    %c0_8 = arith.constant 0 : index
    %c0_9 = arith.constant 0 : index
    %10 = vector.load %arg5[%c0_8, %c0_9] : memref<1x128xf32, #tpu.memory_space<vmem>>, vector<1x128xf32>
    %11 = vector.broadcast %10 : vector<1x128xf32> to vector<8x128xf32>
    %12 = arith.addf %9, %11 : vector<8x128xf32>
    %13 = math.tanh %12 : vector<8x128xf32>
    %14 = arith.truncf %13 : vector<8x128xf32> to vector<8x128xbf16>
    %c0_10 = arith.constant 0 : index
    %c0_11 = arith.constant 0 : index
    %15 = vector.load %arg6[%c0_10, %c0_11] : memref<8x128xbf16, #tpu.memory_space<vmem>>, vector<8x128xbf16>
    tpu.vector_store %arg6[%c0_10, %c0_11], %14 {strides = array<i32>} : memref<8x128xbf16, #tpu.memory_space<vmem>>, vector<8x128xbf16>,
    return
  }
  func.func @transform_0(%arg0: i32) -> (i32, i32) {
    %c0_i32 = arith.constant 0 : i32
    %c0_i32_0 = arith.constant 0 : i32
    return %arg0, %c0_i32 : i32, i32
  }
  func.func @transform_1(%arg0: i32) -> (i32, i32) {
    %c0_i32 = arith.constant 0 : i32
    %c0_i32_0 = arith.constant 0 : i32
    %c0_i32_1 = arith.constant 0 : i32
    return %c0_i32, %c0_i32_0 : i32, i32
  }
  func.func @transform_2(%arg0: i32) -> (i32, i32) {
    %c0_i32 = arith.constant 0 : i32
    %c0_i32_0 = arith.constant 0 : i32
    %c0_i32_1 = arith.constant 0 : i32
    return %c0_i32, %c0_i32_0 : i32, i32
  }
  func.func @transform_3(%arg0: i32) -> (i32, i32) {
    %c0_i32 = arith.constant 0 : i32
    %c0_i32_0 = arith.constant 0 : i32
    %c0_i32_1 = arith.constant 0 : i32
    return %c0_i32, %c0_i32_0 : i32, i32
  }
  func.func @transform_4(%arg0: i32) -> (i32, i32) {
    %c0_i32 = arith.constant 0 : i32
    %c0_i32_0 = arith.constant 0 : i32
    %c0_i32_1 = arith.constant 0 : i32
    return %c0_i32, %c0_i32_0 : i32, i32
  }
  func.func @transform_5(%arg0: i32) -> (i32, i32) {
    %c0_i32 = arith.constant 0 : i32
    %c0_i32_0 = arith.constant 0 : i32
    return %arg0, %c0_i32 : i32, i32
  }
}

</mosaic_0001>

<llo_original>
// kernel: tpu_custom_call.1
$region0: #{tpu_custom_call.1}
  #allocation0 [shape = 'u32[]', space=smem, size = 0x4, offset = 0x4, fixed_abs, tag = 'smem constant byte address 0x4 - core index']
  #allocation1 [shape = 'u32[144,128]{1,0:T(1,128)}', space=vmem, size = 0x12000, scoped, tag = 'internal scratch']
  %s0 = inlined_call_operand.hbm [shape: bf16[8,16], index: 0, kind: input, shape index: {}]
  %s1 = inlined_call_operand.hbm [shape: bf16[16,128], index: 1, kind: input, shape index: {}]
  %s2 = inlined_call_operand.vmem [shape: f32[1,128], index: 2, kind: input, shape index: {}]
  %s3 = inlined_call_operand.hbm [shape: bf16[128,128], index: 3, kind: input, shape index: {}]
  %s4 = inlined_call_operand.vmem [shape: f32[1,128], index: 4, kind: input, shape index: {}]
  %s5 = inlined_call_operand.hbm [shape: bf16[8,128], index: 5, kind: output, shape index: {}]
  %s6 = sld [smem:[#allocation0]]
  $region42: #{tpu_custom_call.1} parent=0
    _
  %s8 = ssub.s32 1, %s6
  %s9 = scalar_select 0, %s8, %s6
  $region1: #{tpu_custom_call.1} parent=0
    #allocation2 [shape = 'u8[2048]{0}', space=vmem, size = 0x800, scoped, tag = 'input window, operand 0, single buffered']
    #allocation3 [shape = 's32[1]{0}', space=sflag, size = 0x4, scoped, tag = 'scoped memory for tpu_custom_call.1']
    #allocation4 [shape = 's32[1]{0}', space=sflag, size = 0x4, scoped, tag = 'scoped memory for tpu_custom_call.1']
    #allocation5 [shape = 'u8[4096]{0}', space=vmem, size = 0x1000, scoped, tag = 'input window, operand 1, single buffered']
    #allocation6 [shape = 's32[1]{0}', space=sflag, size = 0x4, scoped, tag = 'scoped memory for tpu_custom_call.1']
    #allocation7 [shape = 'u8[32768]{0}', space=vmem, size = 0x8000, scoped, tag = 'input window, operand 3, single buffered']
    #allocation8 [shape = 'u8[2048]{0}', space=vmem, size = 0x800, scoped, tag = 'output window, operand 0, single buffered']
    %10 = vsyncpa [#allocation3], 0
    %11 = vsyncpa [#allocation6], 0
    %12 = vsyncpa [#allocation4], 0
    // Predicated region
    $region2: #{tpu_custom_call.1} parent=1 // pred_check
      _
    $region3: #{tpu_custom_call.1} parent=1 // pred_check_branch
      %14 = sbr.rel (0) target = $region5
    $region4: #{tpu_custom_call.1} parent=1 // pred_region
      %s16 = ssub.s32 64, 64
      %17 = vsyncadd [#allocation3], %s16
      %s19 = sshll.u32 [#allocation2], 4
      %s20 = int_to_ptr.vmem [resolvable:$true] %s19
      %22 = dma.hbm_to_vmem [thread:$0]  %s0, 64, %s20, [#allocation3]
    $region5: #{tpu_custom_call.1} parent=1 // pred_fallthru
      _
    // Predicated region
    $region6: #{tpu_custom_call.1} parent=1 // pred_check
      _
    $region7: #{tpu_custom_call.1} parent=1 // pred_check_branch
      %24 = sbr.rel (0) target = $region9
    $region8: #{tpu_custom_call.1} parent=1 // pred_region
      %s26 = ssub.s32 128, 128
      %27 = vsyncadd [#allocation6], %s26
      %s28 = sshll.u32 [#allocation5], 4
      %s29 = int_to_ptr.vmem [resolvable:$true] %s28
      %34 = dma.hbm_to_vmem [thread:$0]  %s1, 128, %s29, [#allocation6], 64, 64, 4
    $region9: #{tpu_custom_call.1} parent=1 // pred_fallthru
      _
    // Predicated region
    $region10: #{tpu_custom_call.1} parent=1 // pred_check
      _
    $region11: #{tpu_custom_call.1} parent=1 // pred_check_branch
      %36 = sbr.rel (0) target = $region13
    $region12: #{tpu_custom_call.1} parent=1 // pred_region
      _
    $region13: #{tpu_custom_call.1} parent=1 // pred_fallthru
      _
    // Predicated region
    $region14: #{tpu_custom_call.1} parent=1 // pred_check
      _
    $region15: #{tpu_custom_call.1} parent=1 // pred_check_branch
      %38 = sbr.rel (0) target = $region17
    $region16: #{tpu_custom_call.1} parent=1 // pred_region
      %s40 = ssub.s32 1024, 1024
      %41 = vsyncadd [#allocation6], %s40
      %s42 = sshll.u32 [#allocation7], 4
      %s43 = int_to_ptr.vmem [resolvable:$true] %s42
      %48 = dma.hbm_to_vmem [thread:$0]  %s3, 1024, %s43, [#allocation6], 64, 64, 4
    $region17: #{tpu_custom_call.1} parent=1 // pred_fallthru
      _
    // Predicated region
    $region18: #{tpu_custom_call.1} parent=1 // pred_check
      _
    $region19: #{tpu_custom_call.1} parent=1 // pred_check_branch
      %50 = sbr.rel (0) target = $region21
    $region20: #{tpu_custom_call.1} parent=1 // pred_region
      _
    $region21: #{tpu_custom_call.1} parent=1 // pred_fallthru
      _
    // Predicated region
    $region22: #{tpu_custom_call.1} parent=1 // pred_check
      _
    $region23: #{tpu_custom_call.1} parent=1 // pred_check_branch
      %52 = sbr.rel (0) target = $region25
    $region24: #{tpu_custom_call.1} parent=1 // pred_region
      %53 = dma.done [#allocation3], 64
    $region25: #{tpu_custom_call.1} parent=1 // pred_fallthru
      _
    // Predicated region
    $region26: #{tpu_custom_call.1} parent=1 // pred_check
      _
    $region27: #{tpu_custom_call.1} parent=1 // pred_check_branch
      %55 = sbr.rel (0) target = $region29
    $region28: #{tpu_custom_call.1} parent=1 // pred_region
      %56 = dma.done [#allocation6], 128
    $region29: #{tpu_custom_call.1} parent=1 // pred_fallthru
      _
    // Predicated region
    $region30: #{tpu_custom_call.1} parent=1 // pred_check
      _
    $region31: #{tpu_custom_call.1} parent=1 // pred_check_branch
      %58 = sbr.rel (0) target = $region33
    $region32: #{tpu_custom_call.1} parent=1 // pred_region
      %59 = dma.done [#allocation6], 1024
    $region33: #{tpu_custom_call.1} parent=1 // pred_fallthru
      _
    %v61 = vld [vmem:[#allocation2] sm:$0xf]
    %v62 = vld [vmem:[#allocation5] sm:$0xf]
    %v63 = vld [vmem:[#allocation5 + $0x4] sm:$0xf]
    %v64 = vld [vmem:[%s2] sm:$0x1]
    %v66 = vlaneseq
    %v67 = vshrl.u32 %v66, 7
    %v68 = vsub.s32 0, %v67
    %v69 = vrot.slane %v64, %v68
    %v73 = vunpack.c.l.b16 %v62
    %v74 = vunpack.c.l.b16 %v63
    %v75 = vpack.c.b16 %v74, %v73
    %vm77 = vcmask 130048
    %v79 = vsel %vm77, %v61, 0
    %81 = vmatprep.subr.bf16.mxu0 0
    %82 = vmatpush1.bf16.msra.mxu0 %v75
    %83 = vmatprep.subr.bf16.mxu0 0
    %84 = vmatpush1.bf16.msra.mxu0 0
    %85 = vmatprep.subr.bf16.mxu0 0
    %86 = vmatpush1.bf16.msra.mxu0 0
    %87 = vmatprep.subr.bf16.mxu0 0
    %88 = vmatpush1.bf16.msra.mxu0 0
    %89 = vmatprep.subr.bf16.mxu0 0
    %90 = vmatpush1.bf16.msra.mxu0 0
    %91 = vmatprep.subr.bf16.mxu0 0
    %92 = vmatpush1.bf16.msra.mxu0 0
    %93 = vmatprep.subr.bf16.mxu0 0
    %94 = vmatpush1.bf16.msra.mxu0 0
    %95 = vmatprep.subr.bf16.mxu0 0
    %96 = vmatpush1.bf16.msra.mxu0 0
    %97 = vmatprep.subr.bf16.mxu0 0
    %98 = vmatpush1.bf16.msra.mxu0 0
    %99 = vmatprep.subr.bf16.mxu0 0
    %100 = vmatpush1.bf16.msra.mxu0 0
    %101 = vmatprep.subr.bf16.mxu0 0
    %102 = vmatpush1.bf16.msra.mxu0 0
    %103 = vmatprep.subr.bf16.mxu0 0
    %104 = vmatpush1.bf16.msra.mxu0 0
    %105 = vmatprep.subr.bf16.mxu0 0
    %106 = vmatpush1.bf16.msra.mxu0 0
    %107 = vmatprep.subr.bf16.mxu0 0
    %108 = vmatpush1.bf16.msra.mxu0 0
    %109 = vmatprep.subr.bf16.mxu0 0
    %110 = vmatpush1.bf16.msra.mxu0 0
    %111 = vmatprep.subr.bf16.mxu0 0
    %112 = vmatpush1.bf16.msra.mxu0 0
    %113 = vmatprep.mubr.bf16.mxu0 0
    %114 = vmatmul.mubr.bf16.gmra.mrb[0].mxu0 %v79
    %v115 = vpop.f32.mrb[0].mxu0
    %v116 = vadd.f32 %v69, %v115
    %v117 = vpop.f32.mrb[0].mxu0
    %v118 = vpop.f32.mrb[0].mxu0
    %v119 = vpop.f32.mrb[0].mxu0
    %120 = vdwg.mxu0
    %v121 = vtanh.pop %v116
    %v122 = vpack.c.bf16 %v121, %v121
    %v123 = vld [vmem:[#allocation7] sm:$0xf]
    %v124 = vld [vmem:[#allocation7 + $0x4] sm:$0xf]
    %v125 = vld [vmem:[#allocation7 + $0x8] sm:$0xf]
    %v126 = vld [vmem:[#allocation7 + $0xc] sm:$0xf]
    %v127 = vld [vmem:[#allocation7 + $0x10] sm:$0xf]
    %v128 = vld [vmem:[#allocation7 + $0x14] sm:$0xf]
    %v129 = vld [vmem:[#allocation7 + $0x18] sm:$0xf]
    %v130 = vld [vmem:[#allocation7 + $0x1c] sm:$0xf]
    %v131 = vld [vmem:[#allocation7 + $0x20] sm:$0xf]
    %v132 = vld [vmem:[#allocation7 + $0x24] sm:$0xf]
    %v133 = vld [vmem:[#allocation7 + $0x28] sm:$0xf]
    %v134 = vld [vmem:[#allocation7 + $0x2c] sm:$0xf]
    %v135 = vld [vmem:[#allocation7 + $0x30] sm:$0xf]
    %v136 = vld [vmem:[#allocation7 + $0x34] sm:$0xf]
    %v137 = vld [vmem:[#allocation7 + $0x38] sm:$0xf]
    %v138 = vld [vmem:[#allocation7 + $0x3c] sm:$0xf]
    %v139 = vld [vmem:[%s4] sm:$0x1]
    %v141 = vlaneseq
    %v142 = vshrl.u32 %v141, 7
    %v143 = vsub.s32 0, %v142
    %v144 = vrot.slane %v139, %v143
    %v162 = vunpack.c.l.b16 %v123
    %v163 = vunpack.c.l.b16 %v124
    %v164 = vunpack.c.l.b16 %v125
    %v165 = vunpack.c.l.b16 %v126
    %v166 = vunpack.c.l.b16 %v127
    %v167 = vunpack.c.l.b16 %v128
    %v168 = vunpack.c.l.b16 %v129
    %v169 = vunpack.c.l.b16 %v130
    %v170 = vunpack.c.l.b16 %v131
    %v171 = vunpack.c.l.b16 %v132
    %v172 = vunpack.c.l.b16 %v133
    %v173 = vunpack.c.l.b16 %v134
    %v174 = vunpack.c.l.b16 %v135
    %v175 = vunpack.c.l.b16 %v136
    %v176 = vunpack.c.l.b16 %v137
    %v177 = vunpack.c.l.b16 %v138
    %v178 = vpack.c.b16 %v163, %v162
    %v179 = vpack.c.b16 %v165, %v164
    %v180 = vpack.c.b16 %v167, %v166
    %v181 = vpack.c.b16 %v169, %v168
    %v182 = vpack.c.b16 %v171, %v170
    %v183 = vpack.c.b16 %v173, %v172
    %v184 = vpack.c.b16 %v175, %v174
    %v185 = vpack.c.b16 %v177, %v176
    %194 = vmatprep.subr.bf16.mxu0 0
    %195 = vmatpush1.bf16.msra.mxu0 %v178
    %196 = vmatprep.subr.bf16.mxu0 0
    %197 = vmatpush1.bf16.msra.mxu0 %v179
    %198 = vmatprep.subr.bf16.mxu0 0
    %199 = vmatpush1.bf16.msra.mxu0 %v180
    %200 = vmatprep.subr.bf16.mxu0 0
    %201 = vmatpush1.bf16.msra.mxu0 %v181
    %202 = vmatprep.subr.bf16.mxu0 0
    %203 = vmatpush1.bf16.msra.mxu0 %v182
    %204 = vmatprep.subr.bf16.mxu0 0
    %205 = vmatpush1.bf16.msra.mxu0 %v183
    %206 = vmatprep.subr.bf16.mxu0 0
    %207 = vmatpush1.bf16.msra.mxu0 %v184
    %208 = vmatprep.subr.bf16.mxu0 0
    %209 = vmatpush1.bf16.msra.mxu0 %v185
    %210 = vmatprep.subr.bf16.mxu0 0
    %211 = vmatpush1.bf16.msra.mxu0 0
    %212 = vmatprep.subr.bf16.mxu0 0
    %213 = vmatpush1.bf16.msra.mxu0 0
    %214 = vmatprep.subr.bf16.mxu0 0
    %215 = vmatpush1.bf16.msra.mxu0 0
    %216 = vmatprep.subr.bf16.mxu0 0
    %217 = vmatpush1.bf16.msra.mxu0 0
    %218 = vmatprep.subr.bf16.mxu0 0
    %219 = vmatpush1.bf16.msra.mxu0 0
    %220 = vmatprep.subr.bf16.mxu0 0
    %221 = vmatpush1.bf16.msra.mxu0 0
    %222 = vmatprep.subr.bf16.mxu0 0
    %223 = vmatpush1.bf16.msra.mxu0 0
    %224 = vmatprep.subr.bf16.mxu0 0
    %225 = vmatpush1.bf16.msra.mxu0 0
    %226 = vmatprep.mubr.bf16.mxu0 0
    %227 = vmatmul.mubr.bf16.gmra.mrb[0].mxu0 %v122
    %v228 = vpop.f32.mrb[0].mxu0
    %v229 = vadd.f32 %v144, %v228
    %v230 = vpop.f32.mrb[0].mxu0
    %v231 = vpop.f32.mrb[0].mxu0
    %v232 = vpop.f32.mrb[0].mxu0
    %233 = vdwg.mxu0
    %v234 = vtanh.pop %v229
    %v235 = vpack.c.bf16 %v234, %v234
    %236 = vst [vmem:[#allocation8] sm:$0xf] %v235
    // Predicated region
    $region34: #{tpu_custom_call.1} parent=1 // pred_check
      _
    $region35: #{tpu_custom_call.1} parent=1 // pred_check_branch
      %238 = sbr.rel (0) target = $region37
    $region36: #{tpu_custom_call.1} parent=1 // pred_region
      %s240 = ssub.s32 64, 64
      %241 = vsyncadd [#allocation4], %s240
      %s243 = sshll.u32 [#allocation8], 4
      %s244 = int_to_ptr.vmem [resolvable:$true] %s243
      %246 = dma.vmem_to_hbm [thread:$0]  %s244, 64, %s5, [#allocation4]
    $region37: #{tpu_custom_call.1} parent=1 // pred_fallthru
      _
    // Predicated region
    $region38: #{tpu_custom_call.1} parent=1 // pred_check
      _
    $region39: #{tpu_custom_call.1} parent=1 // pred_check_branch
      %248 = sbr.rel (0) target = $region41
    $region40: #{tpu_custom_call.1} parent=1 // pred_region
      %249 = dma.done [#allocation4], 64
    $region41: #{tpu_custom_call.1} parent=1 // pred_fallthru
      _
    %250 = vsyncpa [#allocation3], 1
    %251 = vsyncpa [#allocation6], 1
    %252 = vsyncpa [#allocation4], 1

</llo_original>
